<compile_context>
chip_gen: v7x
topology: tpu7x:2x2x1
jax: 0.10.0
libtpu: 0.0.40
codegen_flags: <defaults>
</compile_context>

<pallas_src>
from typing import NamedTuple

import jax
import jax.numpy as jnp
from jax import lax
from jax.experimental import pallas as pl
from jax.experimental.pallas import tpu as pltpu


def _round_up(x, m):
    return ((x + m - 1) // m) * m


# ---------------------------------------------------------------------------
# Chip detection: generation-aware VMEM budget, tile caps, megacore behaviour.
# ---------------------------------------------------------------------------
def _chip_info():
    kind = ""
    try:
        kind = jax.devices()[0].device_kind.lower()
    except Exception:
        pass
    is_v7 = "v7" in kind
    is_v5e = ("v5e" in kind) or ("v5 lite" in kind) or ("v5lite" in kind)
    # Physical VMEM per TensorCore (v7x: 64 MiB/TC, v5e/v6e: 128 MiB).
    vmem_cap = (64 << 20) if is_v7 else (128 << 20)
    try:  # refine with the trace-time hardware query if available
        cap = getattr(pltpu.get_tpu_info(), "vmem_capacity_bytes", None)
        if cap:
            vmem_cap = int(cap)
    except Exception:
        pass
    return {
        "kind": kind,
        "is_v7": is_v7,
        "is_v5e": is_v5e,
        "vmem_cap": vmem_cap,
        # Scoped-VMEM budget we are willing to hand the kernel.
        "vmem_budget": min(int(0.75 * vmem_cap), 96 << 20),
        # Tile caps: v5e/v6e can afford wider N tiles; v7x keeps tn moderate so
        # the per-TC 64 MiB budget (and the N-axis megacore split) work out.
        "tn_cap": 512 if is_v7 else 1024,
        # M tile cap: growing tm cuts redundant weight re-streaming (W traffic =
        # grid_m * |W|); on v5e (4x128 MXU, weight-BW bound) keep M passes at 128.
        "tm_cap": 128 if is_v5e else 512,
    }


# ---------------------------------------------------------------------------
# One-time weight preparation (cache this alongside the dictionary parameters).
# ---------------------------------------------------------------------------
class PreparedDictionary(NamedTuple):
    w_t: jax.Array        # (in_pad, out_pad), compute dtype, transposed, zero-padded
    in_size: int
    out_size: int
    in_pad: int
    out_pad: int
    tn: int
    tk: int
    tm_cap: int
    compute_dtype: object
    chip: dict


def prepare_dictionary(weight, *, compute_dtype=jnp.bfloat16, chip=None):
    """Cast + pad + transpose the (out_size, in_size) dictionary weight once."""
    chip = chip or _chip_info()
    out_size, in_size = weight.shape
    cbytes = jnp.dtype(compute_dtype).itemsize
    obytes = 4  # plan for f32 output tiles (worst case)

    tk_cap = 2048 if cbytes <= 2 else 1024
    tn_cap = chip["tn_cap"]
    tm_cap = chip["tm_cap"]

    in_pad0 = _round_up(in_size, 128)
    out_pad0 = _round_up(out_size, 128)

    # Split K/N into the fewest (8,128)-aligned tiles under the caps; this keeps
    # grid_k == 1 whenever the full K strip fits (the common, cheapest case).
    tk = _round_up(pl.cdiv(in_pad0, pl.cdiv(in_pad0, tk_cap)), 128)
    tn = _round_up(pl.cdiv(out_pad0, pl.cdiv(out_pad0, tn_cap)), 128)

    def est_vmem(tm, tn_, tk_):
        grid_k = pl.cdiv(in_pad0, tk_)
        w_bufs = 3 if grid_k > 1 else 2
        b = 2 * tm * tk_ * cbytes           # x tiles (double-buffered)
        b += w_bufs * tn_ * tk_ * cbytes    # weight tiles
        b += 2 * tm * tn_ * obytes          # output tiles
        if grid_k > 1:
            b += tm * tn_ * 4               # f32 accumulator scratch
        return b

    while est_vmem(tm_cap, tn, tk) > chip["vmem_budget"]:
        if tn > 256:
            tn = max(128, _round_up(tn // 2, 128))
        elif tk > 512:
            tk = max(128, _round_up(tk // 2, 128))
        elif tm_cap > 64:
            tm_cap //= 2
        else:
            break

    in_pad = _round_up(in_size, tk)
    out_pad = _round_up(out_size, tn)

    # cast -> pad -> transpose: the kernel contracts (tm,tk)@(tk,tn) directly,
    # so no per-tile transpose and no in-kernel dtype cast. Zero padding adds
    # nothing to the matmul.
    wp = weight.astype(compute_dtype)
    if (out_pad, in_pad) != (out_size, in_size):
        wp = jnp.pad(wp, ((0, out_pad - out_size), (0, in_pad - in_size)))
    w_t = jnp.transpose(wp)  # (in_pad, out_pad)

    return PreparedDictionary(w_t, in_size, out_size, in_pad, out_pad,
                              tn, tk, tm_cap, compute_dtype, chip)


# ---------------------------------------------------------------------------
# Kernels
# ---------------------------------------------------------------------------
def _matmul_kernel_k1(x_ref, w_ref, o_ref):
    # Single K tile: write the MXU result straight to the output (no scratch,
    # no init/finalize).
    o_ref[...] = jnp.dot(
        x_ref[...], w_ref[...], preferred_element_type=jnp.float32
    ).astype(o_ref.dtype)


def _matmul_kernel_acc(x_ref, w_ref, o_ref, acc_ref):
    # K-accumulation path: f32 accumulator resident across the last grid axis.
    k = pl.program_id(2)

    @pl.when(k == 0)
    def _():
        acc_ref[...] = jnp.zeros_like(acc_ref)

    acc_ref[...] += jnp.dot(x_ref[...], w_ref[...],
                            preferred_element_type=jnp.float32)

    @pl.when(k == pl.num_programs(2) - 1)
    def _():
        o_ref[...] = acc_ref[...].astype(o_ref.dtype)


def _spec(shape, index_map, buffers=None):
    """BlockSpec helper; falls back silently if pipeline_mode is unsupported."""
    if buffers is not None:
        try:
            return pl.BlockSpec(shape, index_map, pipeline_mode=pl.Buffered(buffers))
        except Exception:  # pragma: no cover - older jax without pipeline_mode
            pass
    return pl.BlockSpec(shape, index_map)


# ---------------------------------------------------------------------------
# Forward pass
# ---------------------------------------------------------------------------
def dictionary_forward_prepared(x, prep: PreparedDictionary):
    """y = x @ W.T using a pre-prepared (padded/cast/transposed) dictionary."""
    batch_shape = x.shape[:-1]
    in_size = x.shape[-1]
    assert in_size == prep.in_size, (in_size, prep.in_size)
    out_size = prep.out_size
    out_dtype = x.dtype

    batch = 1
    for d in batch_shape:
        batch *= int(d)
    if batch == 0:  # empty batch: nothing to compute, no kernel launch
        return jnp.zeros((*batch_shape, out_size), dtype=out_dtype)

    chip = prep.chip
    compute_dtype = prep.compute_dtype
    cbytes = jnp.dtype(compute_dtype).itemsize
    obytes = jnp.dtype(out_dtype).itemsize
    sub = 16 if cbytes == 2 else 8          # sublane packing granularity

    tn, tk = prep.tn, prep.tk
    in_pad, out_pad = prep.in_pad, prep.out_pad

    tm = min(prep.tm_cap, _round_up(batch, sub))
    batch_pad = _round_up(batch, tm)
    grid_m = batch_pad // tm
    grid_n = out_pad // tn
    grid_k = in_pad // tk

    # v7x megacore: if the parallel grid is a single point, split the N axis so
    # both TensorCores get half of the weight stream (never shrink tm).
    if (chip["is_v7"] and grid_m * grid_n == 1
            and tn >= 256 and (tn // 2) % 128 == 0):
        tn //= 2
        grid_n = out_pad // tn

    # Pre-cast x to the compute dtype in HBM (halves DMA bytes for bf16) and
    # zero-pad to the tile grid (zeros contribute nothing to the matmul).
    x2 = x.reshape(batch, in_size).astype(compute_dtype)
    if (batch_pad, in_pad) != (batch, in_size):
        x2 = jnp.pad(x2, ((0, batch_pad - batch), (0, in_pad - in_size)))

    x_const = (grid_m == 1 and grid_k == 1)   # x block index never changes
    w_const = (grid_n == 1 and grid_k == 1)   # W block index never changes

    if grid_k == 1:
        grid = (grid_m, grid_n)
        in_specs = [
            _spec((tm, tk), lambda i, j: (i, 0), buffers=1 if x_const else None),
            _spec((tk, tn), lambda i, j: (0, j), buffers=1 if w_const else None),
        ]
        out_specs = pl.BlockSpec((tm, tn), lambda i, j: (i, j))
        scratch_shapes = []
        kernel = _matmul_kernel_k1
        semantics = ("parallel", "parallel")
        x_bufs = 1 if x_const else 2
        w_bufs = 1 if w_const else 2
        acc_bytes = 0
    else:
        grid = (grid_m, grid_n, grid_k)
        # The weight is the only operand with sustained DMA pressure: give it a
        # third buffer when the VMEM budget allows.
        w_bufs = 2
        if (2 * tm * tk * cbytes + 3 * tn * tk * cbytes
                + 2 * tm * tn * obytes + tm * tn * 4) <= chip["vmem_budget"]:
            w_bufs = 3
        in_specs = [
            _spec((tm, tk), lambda i, j, k: (i, k)),
            _spec((tk, tn), lambda i, j, k: (k, j), buffers=w_bufs),
        ]
        # Output keeps the default double buffer so writeback overlaps the next
        # (i, j) tile's compute; VMEM headroom is ample at these tile sizes.
        out_specs = pl.BlockSpec((tm, tn), lambda i, j, k: (i, j))
        scratch_shapes = [pltpu.VMEM((tm, tn), jnp.float32)]
        kernel = _matmul_kernel_acc
        semantics = ("parallel", "parallel", "arbitrary")
        x_bufs = 2
        acc_bytes = tm * tn * 4

    vmem_bytes = (x_bufs * tm * tk * cbytes
                  + w_bufs * tn * tk * cbytes
                  + 2 * tm * tn * obytes
                  + acc_bytes)
    vmem_limit = max(32 << 20,
                     min(int(1.25 * vmem_bytes) + (4 << 20), chip["vmem_budget"]))

    cost = pl.CostEstimate(
        flops=2 * batch_pad * in_pad * out_pad,
        transcendentals=0,
        bytes_accessed=(batch_pad * in_pad * cbytes
                        + in_pad * out_pad * cbytes * grid_m
                        + batch_pad * out_pad * obytes),
    )

    y_pad = pl.pallas_call(
        kernel,
        out_shape=jax.ShapeDtypeStruct((batch_pad, out_pad), out_dtype),
        grid_spec=pltpu.PrefetchScalarGridSpec(
            num_scalar_prefetch=0,
            grid=grid,
            in_specs=in_specs,
            out_specs=out_specs,
            scratch_shapes=scratch_shapes,
        ),
        compiler_params=pltpu.CompilerParams(
            dimension_semantics=semantics,
            vmem_limit_bytes=vmem_limit,
        ),
        cost_estimate=cost,
    )(x2, prep.w_t)

    y = y_pad[:batch, :out_size]
    return y.reshape(*batch_shape, out_size)


def dictionary_forward(x, weight, *, compute_dtype=jnp.bfloat16):
    """Convenience: y = x @ weight.T with weight in PyTorch nn.Linear layout
    (out_size, in_size).

    Default compute dtype is bfloat16 (MXU throughput, half the weight HBM
    traffic); pass compute_dtype=jnp.float32 for float32-parity semantics.
    For repeated calls, prefer `prepare_dictionary(...)` once +
    `dictionary_forward_prepared(...)` per call so the weight cast/pad/transpose
    is not redone every forward.
    """
    return dictionary_forward_prepared(
        x, prepare_dictionary(weight, compute_dtype=compute_dtype))


if __name__ == "__main__":
    key = jax.random.PRNGKey(0)

    def make_case(case_key, batch_shape, n_in, n_out):
        k_w, k_x = jax.random.split(case_key)
        # nn.Linear default init: U(-1/sqrt(in), 1/sqrt(in)), shape (out, in).
        bound = 1.0 / jnp.sqrt(jnp.float32(n_in))
        w = jax.random.uniform(k_w, (n_out, n_in), jnp.float32, -bound, bound)
        xv = jax.random.normal(k_x, (*batch_shape, n_in), jnp.float32)
        return xv, w

    # (batch_shape, in_size, out_size, compute_dtype)
    cases = [
        ((8,), 256, 512, jnp.float32),      # f32 path; single grid point, single-buffered inputs
        ((16,), 1536, 1024, jnp.bfloat16),  # bf16 weight pre-cast in HBM, grid_k == 1 (no scratch)
        ((2, 5), 200, 300, jnp.bfloat16),   # ragged shapes -> padding + output slicing
        ((32,), 2304, 256, jnp.bfloat16),   # K-accumulation path (grid_k > 1), deep-buffered W
    ]

    for case_key, (bshape, n_in, n_out, cdt) in zip(jax.random.split(key, len(cases)), cases):
        x, w = make_case(case_key, bshape, n_in, n_out)
        prep = prepare_dictionary(w, compute_dtype=cdt)   # one-time weight prep (cached)
        y = jax.block_until_ready(dictionary_forward_prepared(x, prep))

        # Reference: same math with the same operand rounding (bf16 cast is the
        # documented throughput tradeoff; f32 case compares against f32 inputs).
        xr = x.astype(cdt).astype(jnp.float32)
        wr = w.astype(cdt).astype(jnp.float32)
        y_ref = jnp.einsum("...k,mk->...m", xr, wr, precision=lax.Precision.HIGHEST)

        assert y.shape == (*bshape, n_out), y.shape
        assert jnp.allclose(y.astype(jnp.float32), y_ref, atol=5e-3, rtol=5e-3), \
            float(jnp.max(jnp.abs(y.astype(jnp.float32) - y_ref)))

    # Empty batch (degenerate case handled without launching the kernel).
    x0 = jnp.zeros((0, 64), jnp.float32)
    w0 = jnp.ones((128, 64), jnp.float32)
    y0 = jax.block_until_ready(dictionary_forward(x0, w0, compute_dtype=jnp.float32))
    assert y0.shape == (0, 128), y0.shape

    print("KERNEL_OK")
</pallas_src>

<mosaic_0001>
module attributes {stable_mosaic.version = 11 : i64} {
  func.func @_matmul_kernel_k1(%arg0: i32, %arg1: i32, %arg2: memref<8x256xf32, #tpu.memory_space<vmem>>, %arg3: memref<256x512xf32, #tpu.memory_space<vmem>>, %arg4: memref<8x512xf32, #tpu.memory_space<vmem>>) attributes {dimension_semantics = [#tpu.dimension_semantics<parallel>, #tpu.dimension_semantics<parallel>], iteration_bounds = array<i64: 1, 1>, scalar_prefetch = 0 : i64, scratch_operands = 0 : i64, tpu.core_type = #tpu.core_type<tc>, window_params = [{pipeline_mode = #tpu.pipeline_mode<synchronous>, transform_indices = @transform_0, window_bounds = array<i64: 8, 256>}, {pipeline_mode = #tpu.pipeline_mode<synchronous>, transform_indices = @transform_1, window_bounds = array<i64: 256, 512>}, {transform_indices = @transform_2, window_bounds = array<i64: 8, 512>}]} {
    %c0 = arith.constant 0 : index
    %c0_0 = arith.constant 0 : index
    %0 = vector.load %arg2[%c0, %c0_0] : memref<8x256xf32, #tpu.memory_space<vmem>>, vector<8x256xf32>
    %c0_1 = arith.constant 0 : index
    %c0_2 = arith.constant 0 : index
    %1 = vector.load %arg3[%c0_1, %c0_2] : memref<256x512xf32, #tpu.memory_space<vmem>>, vector<256x512xf32>
    %cst = arith.constant dense<0.000000e+00> : vector<8x512xf32>
    %2 = tpu.matmul %0, %1, %cst {dimension_numbers = #tpu.dot_dimension_numbers<[1], [0], [0], [1], [0, 0, 1, 1], [], []>} : vector<8x256xf32>, vector<256x512xf32>, vector<8x512xf32> -> vector<8x512xf32>
    %c0_3 = arith.constant 0 : index
    %c0_4 = arith.constant 0 : index
    %3 = vector.load %arg4[%c0_3, %c0_4] : memref<8x512xf32, #tpu.memory_space<vmem>>, vector<8x512xf32>
    tpu.vector_store %arg4[%c0_3, %c0_4], %2 {strides = array<i32>} : memref<8x512xf32, #tpu.memory_space<vmem>>, vector<8x512xf32>,
    return
  }
  func.func @transform_0(%arg0: i32, %arg1: i32) -> (i32, i32) {
    %c0_i32 = arith.constant 0 : i32
    %c0_i32_0 = arith.constant 0 : i32
    return %arg0, %c0_i32 : i32, i32
  }
  func.func @transform_1(%arg0: i32, %arg1: i32) -> (i32, i32) {
    %c0_i32 = arith.constant 0 : i32
    %c0_i32_0 = arith.constant 0 : i32
    return %c0_i32, %arg1 : i32, i32
  }
  func.func @transform_2(%arg0: i32, %arg1: i32) -> (i32, i32) {
    %c0_i32 = arith.constant 0 : i32
    return %arg0, %arg1 : i32, i32
  }
}

</mosaic_0001>

<llo_original>
// kernel: tpu_custom_call.1
$region0: #{tpu_custom_call.1}
  #allocation0 [shape = 'u32[]', space=smem, size = 0x4, offset = 0x4, fixed_abs, tag = 'smem constant byte address 0x4 - core index']
  #allocation1 [shape = 'u32[144,128]{1,0:T(1,128)}', space=vmem, size = 0x12000, scoped, tag = 'internal scratch']
  %s0 = inlined_call_operand.hbm [shape: f32[8,256], index: 0, kind: input, shape index: {}]
  %s1 = inlined_call_operand.hbm [shape: f32[256,512], index: 1, kind: input, shape index: {}]
  %s2 = inlined_call_operand.hbm [shape: f32[8,512], index: 2, kind: output, shape index: {}]
  %s3 = sld [smem:[#allocation0]]
  $region26: #{tpu_custom_call.1} parent=0
    _
  %s5 = ssub.s32 1, %s3
  %s6 = scalar_select 0, %s5, %s3
  $region1: #{tpu_custom_call.1} parent=0
    #allocation2 [shape = 'u8[8192]{0}', space=vmem, size = 0x2000, scoped, tag = 'input window, operand 0, single buffered']
    #allocation3 [shape = 's32[1]{0}', space=sflag, size = 0x4, scoped, tag = 'scoped memory for tpu_custom_call.1']
    #allocation4 [shape = 's32[1]{0}', space=sflag, size = 0x4, scoped, tag = 'scoped memory for tpu_custom_call.1']
    #allocation5 [shape = 'u8[524288]{0}', space=vmem, size = 0x80000, scoped, tag = 'input window, operand 1, single buffered']
    #allocation6 [shape = 's32[1]{0}', space=sflag, size = 0x4, scoped, tag = 'scoped memory for tpu_custom_call.1']
    #allocation7 [shape = 'u8[16384]{0}', space=vmem, size = 0x4000, scoped, tag = 'output window, operand 0, single buffered']
    %7 = vsyncpa [#allocation3], 0
    %8 = vsyncpa [#allocation6], 0
    %9 = vsyncpa [#allocation4], 0
    // Predicated region
    $region2: #{tpu_custom_call.1} parent=1 // pred_check
      _
    $region3: #{tpu_custom_call.1} parent=1 // pred_check_branch
      %11 = sbr.rel (0) target = $region5
    $region4: #{tpu_custom_call.1} parent=1 // pred_region
      %s13 = ssub.s32 256, 256
      %14 = vsyncadd [#allocation3], %s13
      %s16 = sshll.u32 [#allocation2], 4
      %s17 = int_to_ptr.vmem [resolvable:$true] %s16
      %19 = dma.hbm_to_vmem [thread:$0]  %s0, 256, %s17, [#allocation3]
    $region5: #{tpu_custom_call.1} parent=1 // pred_fallthru
      _
    // Predicated region
    $region6: #{tpu_custom_call.1} parent=1 // pred_check
      _
    $region7: #{tpu_custom_call.1} parent=1 // pred_check_branch
      %21 = sbr.rel (0) target = $region9
    $region8: #{tpu_custom_call.1} parent=1 // pred_region
      %s23 = ssub.s32 16384, 16384
      %24 = vsyncadd [#allocation6], %s23
      %s25 = sshll.u32 [#allocation5], 4
      %s26 = int_to_ptr.vmem [resolvable:$true] %s25
      %31 = dma.hbm_to_vmem [thread:$0]  %s1, 16384, %s26, [#allocation6], 512, 512, 32
    $region9: #{tpu_custom_call.1} parent=1 // pred_fallthru
      _
    // Predicated region
    $region10: #{tpu_custom_call.1} parent=1 // pred_check
      _
    $region11: #{tpu_custom_call.1} parent=1 // pred_check_branch
      %33 = sbr.rel (0) target = $region13
    $region12: #{tpu_custom_call.1} parent=1 // pred_region
      %34 = dma.done [#allocation3], 256
    $region13: #{tpu_custom_call.1} parent=1 // pred_fallthru
      _
    // Predicated region
    $region14: #{tpu_custom_call.1} parent=1 // pred_check
      _
    $region15: #{tpu_custom_call.1} parent=1 // pred_check_branch
      %36 = sbr.rel (0) target = $region17
    $region16: #{tpu_custom_call.1} parent=1 // pred_region
      %37 = dma.done [#allocation6], 16384
    $region17: #{tpu_custom_call.1} parent=1 // pred_fallthru
      _
    %v38 = vld [vmem:[#allocation2] sm:$0xff]
    %v39 = vld [vmem:[#allocation2 + $0x8] sm:$0xff]
    %v40 = vld [vmem:[#allocation5] sm:$0xff]
    %v41 = vld [vmem:[#allocation5 + $0x8] sm:$0xff]
    %v42 = vld [vmem:[#allocation5 + $0x10] sm:$0xff]
    %v43 = vld [vmem:[#allocation5 + $0x18] sm:$0xff]
    %v44 = vld [vmem:[#allocation5 + $0x20] sm:$0xff]
    %v45 = vld [vmem:[#allocation5 + $0x28] sm:$0xff]
    %v46 = vld [vmem:[#allocation5 + $0x30] sm:$0xff]
    %v47 = vld [vmem:[#allocation5 + $0x38] sm:$0xff]
    %v48 = vld [vmem:[#allocation5 + $0x40] sm:$0xff]
    %v49 = vld [vmem:[#allocation5 + $0x48] sm:$0xff]
    %v50 = vld [vmem:[#allocation5 + $0x50] sm:$0xff]
    %v51 = vld [vmem:[#allocation5 + $0x58] sm:$0xff]
    %v52 = vld [vmem:[#allocation5 + $0x60] sm:$0xff]
    %v53 = vld [vmem:[#allocation5 + $0x68] sm:$0xff]
    %v54 = vld [vmem:[#allocation5 + $0x70] sm:$0xff]
    %v55 = vld [vmem:[#allocation5 + $0x78] sm:$0xff]
    %v56 = vld [vmem:[#allocation5 + $0x80] sm:$0xff]
    %v57 = vld [vmem:[#allocation5 + $0x88] sm:$0xff]
    %v58 = vld [vmem:[#allocation5 + $0x90] sm:$0xff]
    %v59 = vld [vmem:[#allocation5 + $0x98] sm:$0xff]
    %v60 = vld [vmem:[#allocation5 + $0xa0] sm:$0xff]
    %v61 = vld [vmem:[#allocation5 + $0xa8] sm:$0xff]
    %v62 = vld [vmem:[#allocation5 + $0xb0] sm:$0xff]
    %v63 = vld [vmem:[#allocation5 + $0xb8] sm:$0xff]
    %v64 = vld [vmem:[#allocation5 + $0xc0] sm:$0xff]
    %v65 = vld [vmem:[#allocation5 + $0xc8] sm:$0xff]
    %v66 = vld [vmem:[#allocation5 + $0xd0] sm:$0xff]
    %v67 = vld [vmem:[#allocation5 + $0xd8] sm:$0xff]
    %v68 = vld [vmem:[#allocation5 + $0xe0] sm:$0xff]
    %v69 = vld [vmem:[#allocation5 + $0xe8] sm:$0xff]
    %v70 = vld [vmem:[#allocation5 + $0xf0] sm:$0xff]
    %v71 = vld [vmem:[#allocation5 + $0xf8] sm:$0xff]
    %v72 = vld [vmem:[#allocation5 + $0x100] sm:$0xff]
    %v73 = vld [vmem:[#allocation5 + $0x108] sm:$0xff]
    %v74 = vld [vmem:[#allocation5 + $0x110] sm:$0xff]
    %v75 = vld [vmem:[#allocation5 + $0x118] sm:$0xff]
    %v76 = vld [vmem:[#allocation5 + $0x120] sm:$0xff]
    %v77 = vld [vmem:[#allocation5 + $0x128] sm:$0xff]
    %v78 = vld [vmem:[#allocation5 + $0x130] sm:$0xff]
    %v79 = vld [vmem:[#allocation5 + $0x138] sm:$0xff]
    %v80 = vld [vmem:[#allocation5 + $0x140] sm:$0xff]
    %v81 = vld [vmem:[#allocation5 + $0x148] sm:$0xff]
    %v82 = vld [vmem:[#allocation5 + $0x150] sm:$0xff]
    %v83 = vld [vmem:[#allocation5 + $0x158] sm:$0xff]
    %v84 = vld [vmem:[#allocation5 + $0x160] sm:$0xff]
    %v85 = vld [vmem:[#allocation5 + $0x168] sm:$0xff]
    %v86 = vld [vmem:[#allocation5 + $0x170] sm:$0xff]
    %v87 = vld [vmem:[#allocation5 + $0x178] sm:$0xff]
    %v88 = vld [vmem:[#allocation5 + $0x180] sm:$0xff]
    %v89 = vld [vmem:[#allocation5 + $0x188] sm:$0xff]
    %v90 = vld [vmem:[#allocation5 + $0x190] sm:$0xff]
    %v91 = vld [vmem:[#allocation5 + $0x198] sm:$0xff]
    %v92 = vld [vmem:[#allocation5 + $0x1a0] sm:$0xff]
    %v93 = vld [vmem:[#allocation5 + $0x1a8] sm:$0xff]
    %v94 = vld [vmem:[#allocation5 + $0x1b0] sm:$0xff]
    %v95 = vld [vmem:[#allocation5 + $0x1b8] sm:$0xff]
    %v96 = vld [vmem:[#allocation5 + $0x1c0] sm:$0xff]
    %v97 = vld [vmem:[#allocation5 + $0x1c8] sm:$0xff]
    %v98 = vld [vmem:[#allocation5 + $0x1d0] sm:$0xff]
    %v99 = vld [vmem:[#allocation5 + $0x1d8] sm:$0xff]
    %v100 = vld [vmem:[#allocation5 + $0x1e0] sm:$0xff]
    %v101 = vld [vmem:[#allocation5 + $0x1e8] sm:$0xff]
    %v102 = vld [vmem:[#allocation5 + $0x1f0] sm:$0xff]
    %v103 = vld [vmem:[#allocation5 + $0x1f8] sm:$0xff]
    %v104 = vld [vmem:[#allocation5 + $0x200] sm:$0xff]
    %v105 = vld [vmem:[#allocation5 + $0x208] sm:$0xff]
    %v106 = vld [vmem:[#allocation5 + $0x210] sm:$0xff]
    %v107 = vld [vmem:[#allocation5 + $0x218] sm:$0xff]
    %v108 = vld [vmem:[#allocation5 + $0x220] sm:$0xff]
    %v109 = vld [vmem:[#allocation5 + $0x228] sm:$0xff]
    %v110 = vld [vmem:[#allocation5 + $0x230] sm:$0xff]
    %v111 = vld [vmem:[#allocation5 + $0x238] sm:$0xff]
    %v112 = vld [vmem:[#allocation5 + $0x240] sm:$0xff]
    %v113 = vld [vmem:[#allocation5 + $0x248] sm:$0xff]
    %v114 = vld [vmem:[#allocation5 + $0x250] sm:$0xff]
    %v115 = vld [vmem:[#allocation5 + $0x258] sm:$0xff]
    %v116 = vld [vmem:[#allocation5 + $0x260] sm:$0xff]
    %v117 = vld [vmem:[#allocation5 + $0x268] sm:$0xff]
    %v118 = vld [vmem:[#allocation5 + $0x270] sm:$0xff]
    %v119 = vld [vmem:[#allocation5 + $0x278] sm:$0xff]
    %v120 = vld [vmem:[#allocation5 + $0x280] sm:$0xff]
    %v121 = vld [vmem:[#allocation5 + $0x288] sm:$0xff]
    %v122 = vld [vmem:[#allocation5 + $0x290] sm:$0xff]
    %v123 = vld [vmem:[#allocation5 + $0x298] sm:$0xff]
    %v124 = vld [vmem:[#allocation5 + $0x2a0] sm:$0xff]
    %v125 = vld [vmem:[#allocation5 + $0x2a8] sm:$0xff]
    %v126 = vld [vmem:[#allocation5 + $0x2b0] sm:$0xff]
    %v127 = vld [vmem:[#allocation5 + $0x2b8] sm:$0xff]
    %v128 = vld [vmem:[#allocation5 + $0x2c0] sm:$0xff]
    %v129 = vld [vmem:[#allocation5 + $0x2c8] sm:$0xff]
    %v130 = vld [vmem:[#allocation5 + $0x2d0] sm:$0xff]
    %v131 = vld [vmem:[#allocation5 + $0x2d8] sm:$0xff]
    %v132 = vld [vmem:[#allocation5 + $0x2e0] sm:$0xff]
    %v133 = vld [vmem:[#allocation5 + $0x2e8] sm:$0xff]
    %v134 = vld [vmem:[#allocation5 + $0x2f0] sm:$0xff]
    %v135 = vld [vmem:[#allocation5 + $0x2f8] sm:$0xff]
    %v136 = vld [vmem:[#allocation5 + $0x300] sm:$0xff]
    %v137 = vld [vmem:[#allocation5 + $0x308] sm:$0xff]
    %v138 = vld [vmem:[#allocation5 + $0x310] sm:$0xff]
    %v139 = vld [vmem:[#allocation5 + $0x318] sm:$0xff]
    %v140 = vld [vmem:[#allocation5 + $0x320] sm:$0xff]
    %v141 = vld [vmem:[#allocation5 + $0x328] sm:$0xff]
    %v142 = vld [vmem:[#allocation5 + $0x330] sm:$0xff]
    %v143 = vld [vmem:[#allocation5 + $0x338] sm:$0xff]
    %v144 = vld [vmem:[#allocation5 + $0x340] sm:$0xff]
    %v145 = vld [vmem:[#allocation5 + $0x348] sm:$0xff]
    %v146 = vld [vmem:[#allocation5 + $0x350] sm:$0xff]
    %v147 = vld [vmem:[#allocation5 + $0x358] sm:$0xff]
    %v148 = vld [vmem:[#allocation5 + $0x360] sm:$0xff]
    %v149 = vld [vmem:[#allocation5 + $0x368] sm:$0xff]
    %v150 = vld [vmem:[#allocation5 + $0x370] sm:$0xff]
    %v151 = vld [vmem:[#allocation5 + $0x378] sm:$0xff]
    %v152 = vld [vmem:[#allocation5 + $0x380] sm:$0xff]
    %v153 = vld [vmem:[#allocation5 + $0x388] sm:$0xff]
    %v154 = vld [vmem:[#allocation5 + $0x390] sm:$0xff]
    %v155 = vld [vmem:[#allocation5 + $0x398] sm:$0xff]
    %v156 = vld [vmem:[#allocation5 + $0x3a0] sm:$0xff]
    %v157 = vld [vmem:[#allocation5 + $0x3a8] sm:$0xff]
    %v158 = vld [vmem:[#allocation5 + $0x3b0] sm:$0xff]
    %v159 = vld [vmem:[#allocation5 + $0x3b8] sm:$0xff]
    %v160 = vld [vmem:[#allocation5 + $0x3c0] sm:$0xff]
    %v161 = vld [vmem:[#allocation5 + $0x3c8] sm:$0xff]
    %v162 = vld [vmem:[#allocation5 + $0x3d0] sm:$0xff]
    %v163 = vld [vmem:[#allocation5 + $0x3d8] sm:$0xff]
    %v164 = vld [vmem:[#allocation5 + $0x3e0] sm:$0xff]
    %v165 = vld [vmem:[#allocation5 + $0x3e8] sm:$0xff]
    %v166 = vld [vmem:[#allocation5 + $0x3f0] sm:$0xff]
    %v167 = vld [vmem:[#allocation5 + $0x3f8] sm:$0xff]
    %168 = vmatprep.subr.mxu0 %v41
    %169 = vmatpush1.msra.mxu0 %v40
    %170 = vmatprep.subr.mxu0 %v45
    %171 = vmatpush1.msra.mxu0 %v44
    %172 = vmatprep.subr.mxu0 %v49
    %173 = vmatpush1.msra.mxu0 %v48
    %174 = vmatprep.subr.mxu0 %v53
    %175 = vmatpush1.msra.mxu0 %v52
    %176 = vmatprep.subr.mxu0 %v57
    %177 = vmatpush1.msra.mxu0 %v56
    %178 = vmatprep.subr.mxu0 %v61
    %179 = vmatpush1.msra.mxu0 %v60
    %180 = vmatprep.subr.mxu0 %v65
    %181 = vmatpush1.msra.mxu0 %v64
    %182 = vmatprep.subr.mxu0 %v69
    %183 = vmatpush1.msra.mxu0 %v68
    %184 = vmatprep.subr.mxu0 %v73
    %185 = vmatpush1.msra.mxu0 %v72
    %186 = vmatprep.subr.mxu0 %v77
    %187 = vmatpush1.msra.mxu0 %v76
    %188 = vmatprep.subr.mxu0 %v81
    %189 = vmatpush1.msra.mxu0 %v80
    %190 = vmatprep.subr.mxu0 %v85
    %191 = vmatpush1.msra.mxu0 %v84
    %192 = vmatprep.subr.mxu0 %v89
    %193 = vmatpush1.msra.mxu0 %v88
    %194 = vmatprep.subr.mxu0 %v93
    %195 = vmatpush1.msra.mxu0 %v92
    %196 = vmatprep.subr.mxu0 %v97
    %197 = vmatpush1.msra.mxu0 %v96
    %198 = vmatprep.subr.mxu0 %v101
    %199 = vmatpush1.msra.mxu0 %v100
    %200 = vmatprep.subr.mxu0 %v105
    %201 = vmatpush1.msra.mxu0 %v104
    %202 = vmatprep.subr.mxu0 %v109
    %203 = vmatpush1.msra.mxu0 %v108
    %204 = vmatprep.subr.mxu0 %v113
    %205 = vmatpush1.msra.mxu0 %v112
    %206 = vmatprep.subr.mxu0 %v117
    %207 = vmatpush1.msra.mxu0 %v116
    %208 = vmatprep.subr.mxu0 %v121
    %209 = vmatpush1.msra.mxu0 %v120
    %210 = vmatprep.subr.mxu0 %v125
    %211 = vmatpush1.msra.mxu0 %v124
    %212 = vmatprep.subr.mxu0 %v129
    %213 = vmatpush1.msra.mxu0 %v128
    %214 = vmatprep.subr.mxu0 %v133
    %215 = vmatpush1.msra.mxu0 %v132
    %216 = vmatprep.subr.mxu0 %v137
    %217 = vmatpush1.msra.mxu0 %v136
    %218 = vmatprep.subr.mxu0 %v141
    %219 = vmatpush1.msra.mxu0 %v140
    %220 = vmatprep.subr.mxu0 %v145
    %221 = vmatpush1.msra.mxu0 %v144
    %222 = vmatprep.subr.mxu0 %v149
    %223 = vmatpush1.msra.mxu0 %v148
    %224 = vmatprep.subr.mxu0 %v153
    %225 = vmatpush1.msra.mxu0 %v152
    %226 = vmatprep.subr.mxu0 %v157
    %227 = vmatpush1.msra.mxu0 %v156
    %228 = vmatprep.subr.mxu0 %v161
    %229 = vmatpush1.msra.mxu0 %v160
    %230 = vmatprep.subr.mxu0 %v165
    %231 = vmatpush1.msra.mxu0 %v164
    %232 = vmatprep.mubr.f32.mxu0 %v39
    %233 = vmatmul.mubr.f32.gmra.mrb[0].mxu0 %v38
    %v234 = vpop.f32.mrb[0].mxu0
    %v235 = vadd.f32 0.0, %v234
    %v236 = vpop.f32.mrb[0].mxu0
    %v237 = vadd.f32 0.0, %v236
    %238 = vdwg.mxu0
    %239 = vmatprep.subr.mxu0 %v43
    %240 = vmatpush1.msra.mxu0 %v42
    %241 = vmatprep.subr.mxu0 %v47
    %242 = vmatpush1.msra.mxu0 %v46
    %243 = vmatprep.subr.mxu0 %v51
    %244 = vmatpush1.msra.mxu0 %v50
    %245 = vmatprep.subr.mxu0 %v55
    %246 = vmatpush1.msra.mxu0 %v54
    %247 = vmatprep.subr.mxu0 %v59
    %248 = vmatpush1.msra.mxu0 %v58
    %249 = vmatprep.subr.mxu0 %v63
    %250 = vmatpush1.msra.mxu0 %v62
    %251 = vmatprep.subr.mxu0 %v67
    %252 = vmatpush1.msra.mxu0 %v66
    %253 = vmatprep.subr.mxu0 %v71
    %254 = vmatpush1.msra.mxu0 %v70
    %255 = vmatprep.subr.mxu0 %v75
    %256 = vmatpush1.msra.mxu0 %v74
    %257 = vmatprep.subr.mxu0 %v79
    %258 = vmatpush1.msra.mxu0 %v78
    %259 = vmatprep.subr.mxu0 %v83
    %260 = vmatpush1.msra.mxu0 %v82
    %261 = vmatprep.subr.mxu0 %v87
    %262 = vmatpush1.msra.mxu0 %v86
    %263 = vmatprep.subr.mxu0 %v91
    %264 = vmatpush1.msra.mxu0 %v90
    %265 = vmatprep.subr.mxu0 %v95
    %266 = vmatpush1.msra.mxu0 %v94
    %267 = vmatprep.subr.mxu0 %v99
    %268 = vmatpush1.msra.mxu0 %v98
    %269 = vmatprep.subr.mxu0 %v103
    %270 = vmatpush1.msra.mxu0 %v102
    %271 = vmatprep.subr.mxu0 %v107
    %272 = vmatpush1.msra.mxu0 %v106
    %273 = vmatprep.subr.mxu0 %v111
    %274 = vmatpush1.msra.mxu0 %v110
    %275 = vmatprep.subr.mxu0 %v115
    %276 = vmatpush1.msra.mxu0 %v114
    %277 = vmatprep.subr.mxu0 %v119
    %278 = vmatpush1.msra.mxu0 %v118
    %279 = vmatprep.subr.mxu0 %v123
    %280 = vmatpush1.msra.mxu0 %v122
    %281 = vmatprep.subr.mxu0 %v127
    %282 = vmatpush1.msra.mxu0 %v126
    %283 = vmatprep.subr.mxu0 %v131
    %284 = vmatpush1.msra.mxu0 %v130
    %285 = vmatprep.subr.mxu0 %v135
    %286 = vmatpush1.msra.mxu0 %v134
    %287 = vmatprep.subr.mxu0 %v139
    %288 = vmatpush1.msra.mxu0 %v138
    %289 = vmatprep.subr.mxu0 %v143
    %290 = vmatpush1.msra.mxu0 %v142
    %291 = vmatprep.subr.mxu0 %v147
    %292 = vmatpush1.msra.mxu0 %v146
    %293 = vmatprep.subr.mxu0 %v151
    %294 = vmatpush1.msra.mxu0 %v150
    %295 = vmatprep.subr.mxu0 %v155
    %296 = vmatpush1.msra.mxu0 %v154
    %297 = vmatprep.subr.mxu0 %v159
    %298 = vmatpush1.msra.mxu0 %v158
    %299 = vmatprep.subr.mxu0 %v163
    %300 = vmatpush1.msra.mxu0 %v162
    %301 = vmatprep.subr.mxu0 %v167
    %302 = vmatpush1.msra.mxu0 %v166
    %303 = vmatprep.mubr.f32.mxu0 %v39
    %304 = vmatmul.mubr.f32.gmra.mrb[0].mxu0 %v38
    %v305 = vpop.f32.mrb[0].mxu0
    %v306 = vadd.f32 0.0, %v305
    %v307 = vpop.f32.mrb[0].mxu0
    %v308 = vadd.f32 0.0, %v307
    %309 = vdwg.mxu0
    %310 = vst [vmem:[#allocation7] sm:$0xff] %v235
    %311 = vst [vmem:[#allocation7 + $0x8] sm:$0xff] %v237
    %312 = vst [vmem:[#allocation7 + $0x10] sm:$0xff] %v306
    %313 = vst [vmem:[#allocation7 + $0x18] sm:$0xff] %v308
    // Predicated region
    $region18: #{tpu_custom_call.1} parent=1 // pred_check
      _
    $region19: #{tpu_custom_call.1} parent=1 // pred_check_branch
      %315 = sbr.rel (0) target = $region21
    $region20: #{tpu_custom_call.1} parent=1 // pred_region
      %s317 = ssub.s32 512, 512
      %318 = vsyncadd [#allocation4], %s317
      %s320 = sshll.u32 [#allocation7], 4
      %s321 = int_to_ptr.vmem [resolvable:$true] %s320
      %323 = dma.vmem_to_hbm [thread:$0]  %s321, 512, %s2, [#allocation4]
    $region21: #{tpu_custom_call.1} parent=1 // pred_fallthru
      _
    // Predicated region
    $region22: #{tpu_custom_call.1} parent=1 // pred_check
      _
    $region23: #{tpu_custom_call.1} parent=1 // pred_check_branch
      %325 = sbr.rel (0) target = $region25
    $region24: #{tpu_custom_call.1} parent=1 // pred_region
      %326 = dma.done [#allocation4], 512
    $region25: #{tpu_custom_call.1} parent=1 // pred_fallthru
      _
    %327 = vsyncpa [#allocation3], 1
    %328 = vsyncpa [#allocation6], 1
    %329 = vsyncpa [#allocation4], 1

</llo_original>
